<compile_context>
chip_gen: v7x
topology: tpu7x:2x2x1
jax: 0.10.0
libtpu: 0.0.40
codegen_flags: <defaults>
</compile_context>

<pallas_src>
import functools

import jax
import jax.numpy as jnp
from jax.experimental import pallas as pl
from jax.experimental.pallas import tpu as pltpu


def _round_up(x, m):
    return ((x + m - 1) // m) * m


def _stats_pool_kernel(x_ref, mean_ref, std_ref, sum_acc, sq_acc, *,
                       true_t, stripe_r):
    """x_ref: (tile_r, tile_t) block; outputs are (tile_r, 1) mean / std."""
    t_idx = pl.program_id(1)
    n_t = pl.num_programs(1)
    tile_r, tile_t = x_ref.shape
    t_rem = true_t % tile_t          # static: valid lanes in the last T block

    # Init per-lane accumulators at the first T step of each row tile.
    @pl.when(t_idx == 0)
    def _():
        sum_acc[...] = jnp.zeros_like(sum_acc)
        sq_acc[...] = jnp.zeros_like(sq_acc)

    def accumulate(valid_t):
        """Accumulate sum / sum^2 over the first `valid_t` (static) lanes."""
        n_full = valid_t // 128
        part = valid_t % 128
        if part:
            # Hoisted once: (1, 128) lane-id mask for the partial lane group.
            lane = jax.lax.broadcasted_iota(jnp.int32, (1, 128), 1)
            part_mask = lane < part
        # Row stripes keep the live vreg set small (no spills); scratch is
        # read/written once per stripe.
        r0 = 0
        while r0 < tile_r:                                   # static loop
            sr = min(stripe_r, tile_r - r0)
            s = sum_acc[r0:r0 + sr, :]
            q = sq_acc[r0:r0 + sr, :]
            for j in range(n_full):                          # static, unrolled
                c = x_ref[r0:r0 + sr, j * 128:(j + 1) * 128].astype(jnp.float32)
                s = s + c
                q = q + c * c
            if part:
                c = x_ref[r0:r0 + sr,
                          n_full * 128:(n_full + 1) * 128].astype(jnp.float32)
                c = jnp.where(part_mask, c, 0.0)
                s = s + c
                q = q + c * c
            sum_acc[r0:r0 + sr, :] = s
            sq_acc[r0:r0 + sr, :] = q
            r0 += sr

    if t_rem == 0:
        # Every T block is full: single unmasked hot path.
        accumulate(tile_t)
    else:
        @pl.when(t_idx < n_t - 1)
        def _():
            accumulate(tile_t)

        @pl.when(t_idx == n_t - 1)
        def _():
            accumulate(t_rem)        # mask garbage tail lanes of partial block

    # Finalize: one cross-lane reduce + mean/std epilogue at the last T step.
    @pl.when(t_idx == n_t - 1)
    def _():
        total = jnp.sum(sum_acc[...], axis=-1, keepdims=True)   # (tile_r, 1)
        totsq = jnp.sum(sq_acc[...], axis=-1, keepdims=True)    # (tile_r, 1)
        mean = total * (1.0 / true_t)
        ex2 = totsq - total * mean
        if true_t > 1:
            var = ex2 * (1.0 / (true_t - 1))                    # unbiased
        else:
            var = ex2 * jnp.float32(jnp.nan)   # torch.std: N == 1 -> NaN
        # Clamp tiny negative values from cancellation.
        std = jnp.sqrt(jnp.maximum(var, 0.0))
        mean_ref[...] = mean.astype(mean_ref.dtype)
        std_ref[...] = std.astype(std_ref.dtype)


def stats_pooling(x, *, target_block_bytes=4 * 1024 * 1024,
                  max_tile_t=16384, max_tile_r=4096, stripe_rows=64):
    """x: (B, C, T) -> (B, 2*C) = concat(mean_over_T, std_over_T)."""
    B, C, T = x.shape
    R = B * C
    x2 = x.reshape(R, T)              # contiguous reshape: no copy

    itemsize = x.dtype.itemsize
    target_elems = max(target_block_bytes // itemsize, 8 * 128)

    # --- Tile sizing: aim for ~4 MiB per grid step (amortize per-step cost).
    t_full = _round_up(T, 128)
    tile_t0 = min(t_full, max_tile_t)

    r_cap = min(_round_up(R, 8), max_tile_r)
    if R >= 16:
        # Keep >= 2 row tiles so the "parallel" axis can shard across the two
        # TensorCores on v7x (harmless on single-TC v5e/v6e).
        r_cap = min(r_cap, _round_up(pl.cdiv(R, 2), 8))
    tile_r = max(8, min(r_cap, _round_up(max(target_elems // tile_t0, 8), 8)))
    # If R capped tile_r (short-R / long-T case), regrow the lane tile toward
    # the byte target so per-grid-step overhead stays amortized.
    tile_t = max(128, min(t_full, max_tile_t,
                          _round_up(max(target_elems // tile_r, 128), 128)))

    n_r = pl.cdiv(R, tile_r)
    n_t = pl.cdiv(T, tile_t)
    stripe = max(8, min(stripe_rows, tile_r))

    kernel = functools.partial(_stats_pool_kernel, true_t=T, stripe_r=stripe)
    mean, std = pl.pallas_call(
        kernel,
        out_shape=(
            jax.ShapeDtypeStruct((R, 1), x.dtype),
            jax.ShapeDtypeStruct((R, 1), x.dtype),
        ),
        grid_spec=pltpu.PrefetchScalarGridSpec(
            num_scalar_prefetch=0,
            grid=(n_r, n_t),
            in_specs=[pl.BlockSpec((tile_r, tile_t), lambda r, t: (r, t))],
            out_specs=(
                pl.BlockSpec((tile_r, 1), lambda r, t: (r, 0)),
                pl.BlockSpec((tile_r, 1), lambda r, t: (r, 0)),
            ),
            scratch_shapes=[
                pltpu.VMEM((tile_r, 128), jnp.float32),   # running sum(x)
                pltpu.VMEM((tile_r, 128), jnp.float32),   # running sum(x*x)
            ],
        ),
        compiler_params=pltpu.CompilerParams(
            dimension_semantics=("parallel", "arbitrary"),
            vmem_limit_bytes=32 * 1024 * 1024,
        ),
    )(x2)

    mean = mean[:, 0].reshape(B, C)
    std = std[:, 0].reshape(B, C)
    return jnp.concatenate([mean, std], axis=1)


if __name__ == "__main__":
    key = jax.random.PRNGKey(0)

    # Small shape consistent with the module: (batch, channels, time).
    B, C, T = 2, 4, 16
    x = jax.random.normal(key, (B, C, T), dtype=jnp.float32)

    out = stats_pooling(x)
    jax.block_until_ready(out)

    ref_mean = jnp.mean(x, axis=2)
    ref_std = jnp.std(x, axis=2, ddof=1)       # torch.std default is unbiased
    ref = jnp.concatenate([ref_mean, ref_std], axis=1)
    assert out.shape == (B, 2 * C), out.shape
    assert jnp.allclose(out, ref, atol=1e-5, rtol=1e-5), (out, ref)

    # Odd shape exercising partial R and T blocks (in-kernel masking path).
    B2, C2, T2 = 2, 5, 37
    x2 = jax.random.normal(jax.random.PRNGKey(1), (B2, C2, T2), jnp.float32)
    out2 = stats_pooling(x2)
    jax.block_until_ready(out2)
    ref2 = jnp.concatenate(
        [jnp.mean(x2, axis=2), jnp.std(x2, axis=2, ddof=1)], axis=1)
    assert out2.shape == (B2, 2 * C2), out2.shape
    assert jnp.allclose(out2, ref2, atol=1e-5, rtol=1e-5), (out2, ref2)

    print("KERNEL_OK")
</pallas_src>

<mosaic_0001>
module attributes {stable_mosaic.version = 11 : i64} {
  func.func @_stats_pool_kernel(%arg0: i32, %arg1: i32, %arg2: memref<8x128xf32, #tpu.memory_space<vmem>>, %arg3: memref<8x1xf32, #tpu.memory_space<vmem>>, %arg4: memref<8x1xf32, #tpu.memory_space<vmem>>, %arg5: memref<8x128xf32, #tpu.memory_space<vmem>>, %arg6: memref<8x128xf32, #tpu.memory_space<vmem>>) attributes {dimension_semantics = [#tpu.dimension_semantics<parallel>, #tpu.dimension_semantics<arbitrary>], iteration_bounds = array<i64: 1, 1>, scalar_prefetch = 0 : i64, scratch_operands = 2 : i64, tpu.core_type = #tpu.core_type<tc>, window_params = [{transform_indices = @transform_0, window_bounds = array<i64: 8, 128>}, {transform_indices = @transform_1, window_bounds = array<i64: 8, 1>}, {transform_indices = @transform_2, window_bounds = array<i64: 8, 1>}]} {
    %c0_i32 = arith.constant 0 : i32
    %0 = arith.cmpi eq, %arg1, %c0_i32 : i32
    %1 = arith.extui %0 : i1 to i32
    %c0_i32_0 = arith.constant 0 : i32
    %2 = arith.cmpi ne, %1, %c0_i32_0 : i32
    scf.if %2 {
      %cst = arith.constant 0.000000e+00 : f32
      %12 = vector.broadcast %cst : f32 to vector<8x128xf32>
      %c0 = arith.constant 0 : index
      %c0_7 = arith.constant 0 : index
      %13 = vector.load %arg5[%c0, %c0_7] : memref<8x128xf32, #tpu.memory_space<vmem>>, vector<8x128xf32>
      tpu.vector_store %arg5[%c0, %c0_7], %12 {strides = array<i32>} : memref<8x128xf32, #tpu.memory_space<vmem>>, vector<8x128xf32>,
      %cst_8 = arith.constant 0.000000e+00 : f32
      %14 = vector.broadcast %cst_8 : f32 to vector<8x128xf32>
      %c0_9 = arith.constant 0 : index
      %c0_10 = arith.constant 0 : index
      %15 = vector.load %arg6[%c0_9, %c0_10] : memref<8x128xf32, #tpu.memory_space<vmem>>, vector<8x128xf32>
      tpu.vector_store %arg6[%c0_9, %c0_10], %14 {strides = array<i32>} : memref<8x128xf32, #tpu.memory_space<vmem>>, vector<8x128xf32>,
    } else {
    }
    %c0_i32_1 = arith.constant 0 : i32
    %3 = arith.cmpi slt, %arg1, %c0_i32_1 : i32
    %4 = arith.extui %3 : i1 to i32
    %c0_i32_2 = arith.constant 0 : i32
    %5 = arith.cmpi ne, %4, %c0_i32_2 : i32
    scf.if %5 {
      %c0 = arith.constant 0 : index
      %c0_7 = arith.constant 0 : index
      %12 = vector.load %arg5[%c0, %c0_7] : memref<8x128xf32, #tpu.memory_space<vmem>>, vector<8x128xf32>
      %c0_8 = arith.constant 0 : index
      %c0_9 = arith.constant 0 : index
      %13 = vector.load %arg6[%c0_8, %c0_9] : memref<8x128xf32, #tpu.memory_space<vmem>>, vector<8x128xf32>
      %c0_10 = arith.constant 0 : index
      %c0_11 = arith.constant 0 : index
      %14 = vector.load %arg2[%c0_10, %c0_11] : memref<8x128xf32, #tpu.memory_space<vmem>>, vector<8x128xf32>
      %15 = arith.addf %12, %14 : vector<8x128xf32>
      %16 = arith.mulf %14, %14 : vector<8x128xf32>
      %17 = arith.addf %13, %16 : vector<8x128xf32>
      %c0_12 = arith.constant 0 : index
      %c0_13 = arith.constant 0 : index
      %18 = vector.load %arg5[%c0_12, %c0_13] : memref<8x128xf32, #tpu.memory_space<vmem>>, vector<8x128xf32>
      tpu.vector_store %arg5[%c0_12, %c0_13], %15 {strides = array<i32>} : memref<8x128xf32, #tpu.memory_space<vmem>>, vector<8x128xf32>,
      %c0_14 = arith.constant 0 : index
      %c0_15 = arith.constant 0 : index
      %19 = vector.load %arg6[%c0_14, %c0_15] : memref<8x128xf32, #tpu.memory_space<vmem>>, vector<8x128xf32>
      tpu.vector_store %arg6[%c0_14, %c0_15], %17 {strides = array<i32>} : memref<8x128xf32, #tpu.memory_space<vmem>>, vector<8x128xf32>,
    } else {
    }
    %c0_i32_3 = arith.constant 0 : i32
    %6 = arith.cmpi eq, %arg1, %c0_i32_3 : i32
    %7 = arith.extui %6 : i1 to i32
    %c0_i32_4 = arith.constant 0 : i32
    %8 = arith.cmpi ne, %7, %c0_i32_4 : i32
    scf.if %8 {
      %12 = tpu.iota {dimensions = array<i32: 1>} : vector<1x128xi32>
      %c16_i32 = arith.constant 16 : i32
      %13 = vector.broadcast %c16_i32 : i32 to vector<1x128xi32>
      %14 = arith.cmpi slt, %12, %13 : vector<1x128xi32>
      %c0 = arith.constant 0 : index
      %c0_7 = arith.constant 0 : index
      %15 = vector.load %arg5[%c0, %c0_7] : memref<8x128xf32, #tpu.memory_space<vmem>>, vector<8x128xf32>
      %c0_8 = arith.constant 0 : index
      %c0_9 = arith.constant 0 : index
      %16 = vector.load %arg6[%c0_8, %c0_9] : memref<8x128xf32, #tpu.memory_space<vmem>>, vector<8x128xf32>
      %c0_10 = arith.constant 0 : index
      %c0_11 = arith.constant 0 : index
      %17 = vector.load %arg2[%c0_10, %c0_11] : memref<8x128xf32, #tpu.memory_space<vmem>>, vector<8x128xf32>
      %cst = arith.constant 0.000000e+00 : f32
      %18 = vector.shape_cast %14 : vector<1x128xi1> to vector<1x128xi1>
      %19 = vector.broadcast %18 : vector<1x128xi1> to vector<8x128xi1>
      %20 = vector.broadcast %cst : f32 to vector<8x128xf32>
      %21 = arith.select %19, %17, %20 : vector<8x128xi1>, vector<8x128xf32>
      %22 = arith.addf %15, %21 : vector<8x128xf32>
      %23 = arith.mulf %21, %21 : vector<8x128xf32>
      %24 = arith.addf %16, %23 : vector<8x128xf32>
      %c0_12 = arith.constant 0 : index
      %c0_13 = arith.constant 0 : index
      %25 = vector.load %arg5[%c0_12, %c0_13] : memref<8x128xf32, #tpu.memory_space<vmem>>, vector<8x128xf32>
      tpu.vector_store %arg5[%c0_12, %c0_13], %22 {strides = array<i32>} : memref<8x128xf32, #tpu.memory_space<vmem>>, vector<8x128xf32>,
      %c0_14 = arith.constant 0 : index
      %c0_15 = arith.constant 0 : index
      %26 = vector.load %arg6[%c0_14, %c0_15] : memref<8x128xf32, #tpu.memory_space<vmem>>, vector<8x128xf32>
      tpu.vector_store %arg6[%c0_14, %c0_15], %24 {strides = array<i32>} : memref<8x128xf32, #tpu.memory_space<vmem>>, vector<8x128xf32>,
    } else {
    }
    %c0_i32_5 = arith.constant 0 : i32
    %9 = arith.cmpi eq, %arg1, %c0_i32_5 : i32
    %10 = arith.extui %9 : i1 to i32
    %c0_i32_6 = arith.constant 0 : i32
    %11 = arith.cmpi ne, %10, %c0_i32_6 : i32
    scf.if %11 {
      %c0 = arith.constant 0 : index
      %c0_7 = arith.constant 0 : index
      %12 = vector.load %arg5[%c0, %c0_7] : memref<8x128xf32, #tpu.memory_space<vmem>>, vector<8x128xf32>
      %cst = arith.constant dense<0.000000e+00> : vector<8xf32>
      %13 = vector.multi_reduction <add>, %12, %cst [1] : vector<8x128xf32> to vector<8xf32>
      %14 = vector.shape_cast %13 : vector<8xf32> to vector<8x1xf32>
      %c0_8 = arith.constant 0 : index
      %c0_9 = arith.constant 0 : index
      %15 = vector.load %arg6[%c0_8, %c0_9] : memref<8x128xf32, #tpu.memory_space<vmem>>, vector<8x128xf32>
      %cst_10 = arith.constant dense<0.000000e+00> : vector<8xf32>
      %16 = vector.multi_reduction <add>, %15, %cst_10 [1] : vector<8x128xf32> to vector<8xf32>
      %17 = vector.shape_cast %16 : vector<8xf32> to vector<8x1xf32>
      %cst_11 = arith.constant 6.250000e-02 : f32
      %18 = vector.broadcast %cst_11 : f32 to vector<8x1xf32>
      %19 = arith.mulf %14, %18 : vector<8x1xf32>
      %20 = arith.mulf %14, %19 : vector<8x1xf32>
      %21 = arith.subf %17, %20 : vector<8x1xf32>
      %cst_12 = arith.constant 0.0666666701 : f32
      %22 = vector.broadcast %cst_12 : f32 to vector<8x1xf32>
      %23 = arith.mulf %21, %22 : vector<8x1xf32>
      %cst_13 = arith.constant 0.000000e+00 : f32
      %24 = vector.broadcast %cst_13 : f32 to vector<8x1xf32>
      %25 = arith.maximumf %23, %24 : vector<8x1xf32>
      %26 = math.sqrt %25 : vector<8x1xf32>
      %c0_14 = arith.constant 0 : index
      %c0_15 = arith.constant 0 : index
      %27 = vector.load %arg3[%c0_14, %c0_15] : memref<8x1xf32, #tpu.memory_space<vmem>>, vector<8x1xf32>
      tpu.vector_store %arg3[%c0_14, %c0_15], %19 {strides = array<i32>} : memref<8x1xf32, #tpu.memory_space<vmem>>, vector<8x1xf32>,
      %c0_16 = arith.constant 0 : index
      %c0_17 = arith.constant 0 : index
      %28 = vector.load %arg4[%c0_16, %c0_17] : memref<8x1xf32, #tpu.memory_space<vmem>>, vector<8x1xf32>
      tpu.vector_store %arg4[%c0_16, %c0_17], %26 {strides = array<i32>} : memref<8x1xf32, #tpu.memory_space<vmem>>, vector<8x1xf32>,
    } else {
    }
    return
  }
  func.func @transform_0(%arg0: i32, %arg1: i32) -> (i32, i32) {
    %c0_i32 = arith.constant 0 : i32
    return %arg0, %arg1 : i32, i32
  }
  func.func @transform_1(%arg0: i32, %arg1: i32) -> (i32, i32) {
    %c0_i32 = arith.constant 0 : i32
    %c0_i32_0 = arith.constant 0 : i32
    return %arg0, %c0_i32 : i32, i32
  }
  func.func @transform_2(%arg0: i32, %arg1: i32) -> (i32, i32) {
    %c0_i32 = arith.constant 0 : i32
    %c0_i32_0 = arith.constant 0 : i32
    return %arg0, %c0_i32 : i32, i32
  }
}

</mosaic_0001>

<llo_original>
// kernel: tpu_custom_call.1
$region0: #{tpu_custom_call.1}
  #allocation0 [shape = 'u32[]', space=smem, size = 0x4, offset = 0x4, fixed_abs, tag = 'smem constant byte address 0x4 - core index']
  #allocation1 [shape = 'u32[144,128]{1,0:T(1,128)}', space=vmem, size = 0x12000, scoped, tag = 'internal scratch']
  #allocation2 [shape = 'f32[8,128]{1,0:T(8,128)}', space=vmem, size = 0x1000, scoped, tag = 'scratch operand']
  #allocation3 [shape = 'f32[8,128]{1,0:T(8,128)}', space=vmem, size = 0x1000, scoped, tag = 'scratch operand']
  %s0 = inlined_call_operand.hbm [shape: f32[8,16], index: 0, kind: input, shape index: {}]
  %s1 = inlined_call_operand.vmem [shape: f32[8,1], index: 1, kind: output, shape index: {0}]
  %s2 = inlined_call_operand.vmem [shape: f32[8,1], index: 2, kind: output, shape index: {1}]
  %3 = xla_tuple %s1, %s2
  %s4 = sld [smem:[#allocation0]]
  $region38: #{tpu_custom_call.1} parent=0
    _
  %s6 = ssub.s32 1, %s4
  %s7 = scalar_select 0, %s6, %s4
  $region1: #{tpu_custom_call.1} parent=0
    #allocation4 [shape = 'u8[4096]{0}', space=vmem, size = 0x1000, scoped, tag = 'input window, operand 0, single buffered']
    #allocation5 [shape = 's32[1]{0}', space=sflag, size = 0x4, scoped, tag = 'scoped memory for tpu_custom_call.1']
    %8 = vsyncpa [#allocation5], 0
    // Predicated region
    $region2: #{tpu_custom_call.1} parent=1 // pred_check
      _
    $region3: #{tpu_custom_call.1} parent=1 // pred_check_branch
      %10 = sbr.rel (0) target = $region5
    $region4: #{tpu_custom_call.1} parent=1 // pred_region
      %s12 = ssub.s32 128, 128
      %13 = vsyncadd [#allocation5], %s12
      %s15 = sshll.u32 [#allocation4], 4
      %s16 = int_to_ptr.vmem [resolvable:$true] %s15
      %18 = dma.hbm_to_vmem [thread:$0]  %s0, 128, %s16, [#allocation5]
    $region5: #{tpu_custom_call.1} parent=1 // pred_fallthru
      _
    // Predicated region
    $region6: #{tpu_custom_call.1} parent=1 // pred_check
      _
    $region7: #{tpu_custom_call.1} parent=1 // pred_check_branch
      %20 = sbr.rel (0) target = $region9
    $region8: #{tpu_custom_call.1} parent=1 // pred_region
      %21 = dma.done [#allocation5], 128
    $region9: #{tpu_custom_call.1} parent=1 // pred_fallthru
      _
    %p22 = scmp.eq.s32.totalorder 0, 0
    // Predicated region
    $region10: #{tpu_custom_call.1} parent=1 // pred_check
      %p23 = pneg %p22
    $region11: #{tpu_custom_call.1} parent=1 // pred_check_branch
      %25 = sbr.rel (%p23) target = $region13
    $region12: #{tpu_custom_call.1} parent=1 // pred_region
      %26 = vst [vmem:[#allocation2] sm:$0xff] 0.0
      %27 = vst [vmem:[#allocation3] sm:$0xff] 0.0
    $region13: #{tpu_custom_call.1} parent=1 // pred_fallthru
      _
    %p28 = scmp.lt.s32.totalorder 0, 0
    // Predicated region
    $region14: #{tpu_custom_call.1} parent=1 // pred_check
      %p29 = pneg %p28
    $region15: #{tpu_custom_call.1} parent=1 // pred_check_branch
      %31 = sbr.rel (%p29) target = $region17
    $region16: #{tpu_custom_call.1} parent=1 // pred_region
      %v32 = vld [vmem:[#allocation2] sm:$0xff]
      %v33 = vld [vmem:[#allocation3] sm:$0xff]
      %v34 = vld [vmem:[#allocation4] sm:$0xff]
      %v35 = vadd.f32 %v32, %v34
      %v36 = vmul.f32 %v34, %v34
      %v37 = vadd.f32 %v33, %v36
      %38 = vst [vmem:[#allocation2] sm:$0xff] %v35
      %39 = vst [vmem:[#allocation3] sm:$0xff] %v37
    $region17: #{tpu_custom_call.1} parent=1 // pred_fallthru
      _
    // Predicated region
    $region18: #{tpu_custom_call.1} parent=1 // pred_check
      %p40 = pneg %p22
    $region19: #{tpu_custom_call.1} parent=1 // pred_check_branch
      %42 = sbr.rel (%p40) target = $region21
    $region20: #{tpu_custom_call.1} parent=1 // pred_region
      %v43 = vlaneseq
      %v44 = vand.u32 %v43, 127
      %vm45 = vcmp.lt.s32.totalorder %v44, 16
      %v46 = vld [vmem:[#allocation2] sm:$0xff]
      %v47 = vld [vmem:[#allocation3] sm:$0xff]
      %v48 = vld [vmem:[#allocation4] sm:$0xff]
      %v49 = vsel %vm45, 1, 0
      %vm50 = vcmp.eq.s32.totalorder %v49, 1
      %v51 = vsel %vm50, %v48, 0.0
      %v52 = vadd.f32 %v46, %v51
      %v53 = vmul.f32 %v51, %v51
      %v54 = vadd.f32 %v47, %v53
      %55 = vst [vmem:[#allocation2] sm:$0xff] %v52
      %56 = vst [vmem:[#allocation3] sm:$0xff] %v54
      %v57 = vld [vmem:[#allocation2] sm:$0xff]
      %58 = vadd.xlane.f32.xlu0 %v57
      %v59 = vpop.xlane.xlu0 %58
      %v60 = vld [vmem:[#allocation3] sm:$0xff]
      %61 = vadd.xlane.f32.xlu0 %v60
      %v62 = vpop.xlane.xlu0 %61
      %v63 = vmul.f32 %v59, 0.0625
      %v64 = vmul.f32 %v59, %v63
      %v65 = vsub.f32 %v62, %v64
      %v66 = vmul.f32 %v65, 0.06666667
      %v67 = vmax.f32 %v66, 0.0
      %v68 = vrsqrt.pop %v67
      %v69 = vmul.f32 %v67, %v68
      %vm70 = vcmp.eq.f32.partialorder %v67, inf
      %v71 = vsel %vm70, %v67, %v69
      %vm72 = vcmp.eq.f32.partialorder %v67, 0.0
      %v73 = vand.u32 %v67, 2147483648
      %v74 = vsel %vm72, %v73, %v71
      %vm75 = vcmask 7168
      %76 = vst.msk [vmem:[%s1] sm:$0xff] %vm75, %v63
      %77 = vst.msk [vmem:[%s2] sm:$0xff] %vm75, %v74
    $region21: #{tpu_custom_call.1} parent=1 // pred_fallthru
      _
    // Predicated region
    $region22: #{tpu_custom_call.1} parent=1 // pred_check
      _
    $region23: #{tpu_custom_call.1} parent=1 // pred_check_branch
      %79 = sbr.rel (0) target = $region25
    $region24: #{tpu_custom_call.1} parent=1 // pred_region
      _
    $region25: #{tpu_custom_call.1} parent=1 // pred_fallthru
      _
    // Predicated region
    $region26: #{tpu_custom_call.1} parent=1 // pred_check
      _
    $region27: #{tpu_custom_call.1} parent=1 // pred_check_branch
      %81 = sbr.rel (0) target = $region29
    $region28: #{tpu_custom_call.1} parent=1 // pred_region
      _
    $region29: #{tpu_custom_call.1} parent=1 // pred_fallthru
      _
    // Predicated region
    $region30: #{tpu_custom_call.1} parent=1 // pred_check
      _
    $region31: #{tpu_custom_call.1} parent=1 // pred_check_branch
      %83 = sbr.rel (0) target = $region33
    $region32: #{tpu_custom_call.1} parent=1 // pred_region
      _
    $region33: #{tpu_custom_call.1} parent=1 // pred_fallthru
      _
    // Predicated region
    $region34: #{tpu_custom_call.1} parent=1 // pred_check
      _
    $region35: #{tpu_custom_call.1} parent=1 // pred_check_branch
      %85 = sbr.rel (0) target = $region37
    $region36: #{tpu_custom_call.1} parent=1 // pred_region
      _
    $region37: #{tpu_custom_call.1} parent=1 // pred_fallthru
      _
    %86 = vsyncpa [#allocation5], 1

</llo_original>
